<compile_context>
chip_gen: v7x
topology: tpu7x:2x2x1
jax: 0.10.0
libtpu: 0.0.40
codegen_flags: <defaults>
</compile_context>

<pallas_src>
import functools

import jax
import jax.numpy as jnp
from jax.experimental import pallas as pl
from jax.experimental.pallas import tpu as pltpu


_TARGET_TILE_BYTES = 4 << 20   # >=4 MiB input tile amortizes per-grid-step overhead


def _round_up(a: int, b: int) -> int:
    return (a + b - 1) // b * b


def _vmem_budget_bytes() -> int:
    try:
        cap = int(pltpu.get_tpu_info().vmem_capacity_bytes)
    except Exception:
        cap = 64 << 20          # conservative fallback: v7x per-TensorCore VMEM
    return cap // 2             # leave headroom for compiler scratch / pipelining


def _sublane(itemsize: int) -> int:
    return max(8, 32 // itemsize)   # 8 rows f32, 16 bf16, 32 int8


# --------------------------------------------------------------------------- #
# Single-pass kernel: whole feature row (full D) fits in one VMEM block.
# --------------------------------------------------------------------------- #
def _normalize_kernel(x_ref, o_ref, *, power):
    xf = x_ref[...].astype(jnp.float32)        # f32 for reduction and scale
    if power == 2:
        s = jnp.sum(xf * xf, axis=1, keepdims=True)
        inv = jax.lax.rsqrt(s)                 # single EUP op (free slot)
    else:
        # Matches the PyTorch module verbatim: x.pow(p).sum(1).pow(1/p), no abs/eps.
        s = jnp.sum(xf ** power, axis=1, keepdims=True)
        inv = s ** (-1.0 / power)
    # Scale in f32, downcast exactly once (store traffic unchanged).
    o_ref[...] = (xf * inv).astype(o_ref.dtype)


def _normalize_single_pass(x, power, tile_n, vmem_limit):
    n, d = x.shape
    kernel = functools.partial(_normalize_kernel, power=power)
    return pl.pallas_call(
        kernel,
        out_shape=jax.ShapeDtypeStruct((n, d), x.dtype),
        grid_spec=pltpu.PrefetchScalarGridSpec(
            num_scalar_prefetch=0,
            grid=(pl.cdiv(n, tile_n),),
            in_specs=[pl.BlockSpec((tile_n, d), lambda i: (i, 0))],
            out_specs=pl.BlockSpec((tile_n, d), lambda i: (i, 0)),
        ),
        compiler_params=pltpu.CompilerParams(
            dimension_semantics=("parallel",),       # shard row tiles across TCs
            vmem_limit_bytes=int(vmem_limit),
        ),
    )(x)


# --------------------------------------------------------------------------- #
# Chunked-D fallback (very large D): pass 1 reduces D chunks into a per-row
# inverse norm, pass 2 streams x again and scales each chunk.
# --------------------------------------------------------------------------- #
def _partial_norm_kernel(x_ref, inv_ref, acc_ref, *, power, d, tile_d):
    j = pl.program_id(1)

    @pl.when(j == 0)
    def _():
        acc_ref[...] = jnp.zeros_like(acc_ref)

    xf = x_ref[...].astype(jnp.float32)
    # Mask out-of-range columns of the last (partial) D chunk so garbage lanes
    # never contaminate the row sum.
    col = j * tile_d + jax.lax.broadcasted_iota(jnp.int32, xf.shape, 1)
    xf = jnp.where(col < d, xf, 0.0)
    if power == 2:
        acc_ref[...] += jnp.sum(xf * xf, axis=1, keepdims=True)
    else:
        acc_ref[...] += jnp.sum(xf ** power, axis=1, keepdims=True)

    @pl.when(j == pl.num_programs(1) - 1)
    def _():
        s = acc_ref[...]
        if power == 2:
            inv_ref[...] = jax.lax.rsqrt(s)
        else:
            inv_ref[...] = s ** (-1.0 / power)


def _scale_kernel(x_ref, inv_ref, o_ref):
    o_ref[...] = (x_ref[...].astype(jnp.float32) * inv_ref[...]).astype(o_ref.dtype)


def _normalize_chunked(x, power, tile_n, tile_d, vmem_limit):
    n, d = x.shape
    grid = (pl.cdiv(n, tile_n), pl.cdiv(d, tile_d))

    inv = pl.pallas_call(
        functools.partial(_partial_norm_kernel, power=power, d=d, tile_d=tile_d),
        out_shape=jax.ShapeDtypeStruct((n, 1), jnp.float32),
        grid_spec=pltpu.PrefetchScalarGridSpec(
            num_scalar_prefetch=0,
            grid=grid,
            in_specs=[pl.BlockSpec((tile_n, tile_d), lambda i, j: (i, j))],
            out_specs=pl.BlockSpec((tile_n, 1), lambda i, j: (i, 0)),
            scratch_shapes=[pltpu.VMEM((tile_n, 1), jnp.float32)],
        ),
        compiler_params=pltpu.CompilerParams(
            dimension_semantics=("parallel", "arbitrary"),
            vmem_limit_bytes=int(vmem_limit),
        ),
    )(x)

    return pl.pallas_call(
        _scale_kernel,
        out_shape=jax.ShapeDtypeStruct((n, d), x.dtype),
        grid_spec=pltpu.PrefetchScalarGridSpec(
            num_scalar_prefetch=0,
            grid=grid,
            in_specs=[pl.BlockSpec((tile_n, tile_d), lambda i, j: (i, j)),
                      pl.BlockSpec((tile_n, 1), lambda i, j: (i, 0))],
            out_specs=pl.BlockSpec((tile_n, tile_d), lambda i, j: (i, j)),
        ),
        compiler_params=pltpu.CompilerParams(
            dimension_semantics=("parallel", "parallel"),
            vmem_limit_bytes=int(vmem_limit),
        ),
    )(x, inv)


# --------------------------------------------------------------------------- #
# Wrapper: tile sizing + dispatch.
# --------------------------------------------------------------------------- #
def normalize(x: jax.Array, power: int = 2, *, _force_tile_d: int | None = None) -> jax.Array:
    """L-p normalize each row of x (axis=1), matching the PyTorch `Normalize` module."""
    assert x.ndim == 2, "expects flattened [N, D] features; dim=1 is normalized"
    n, d = x.shape
    itemsize = jnp.dtype(x.dtype).itemsize
    sub = _sublane(itemsize)
    budget = _vmem_budget_bytes()

    # Per-row VMEM accounting: double-buffered in + out blocks + one f32-wide
    # intermediate (the upcast tile lives mostly in vregs; 1x f32 is headroom).
    per_row = d * (2 * itemsize + 2 * itemsize + 4)

    needs_chunked_d = (_force_tile_d is not None) or (sub * per_row > budget)

    if not needs_chunked_d:
        vmem_rows = max(sub, budget // per_row)
        target_rows = max(sub, _TARGET_TILE_BYTES // max(1, d * itemsize))
        tile_n = min(vmem_rows, target_rows)
        if n > sub:
            # Guarantee >=2 grid steps so the parallel axis engages both v7x TCs.
            tile_n = min(tile_n, _round_up(pl.cdiv(n, 2), sub))
        tile_n = min(tile_n, _round_up(n, sub))
        tile_n = max(sub, (tile_n // sub) * sub)
        # TODO(synk): for D << 128, pack features into the lane dim instead of
        # relying on masked partial stores (tiny-D shapes waste lane bandwidth).
        return _normalize_single_pass(x, power, tile_n, budget)

    # Chunked-D fallback (rows too wide for VMEM, or forced in tests).
    if _force_tile_d is not None:
        tile_d = _round_up(_force_tile_d, 128)
        tile_n = max(sub, min(_round_up(n, sub), 8 * sub))
    else:
        tile_n = 8 * sub
        per_elem = 2 * itemsize + 2 * itemsize + 4
        tile_d = max(128, (budget // (tile_n * per_elem)) // 128 * 128)
    tile_d = min(tile_d, _round_up(d, 128))
    return _normalize_chunked(x, power, tile_n, tile_d, budget)


if __name__ == "__main__":
    def ref_normalize(xx, p=2):
        xf = xx.astype(jnp.float32)
        norm = jnp.sum(xf ** p, axis=1, keepdims=True) ** (1.0 / p)
        return (xf / norm).astype(xx.dtype)

    # 1) lane-aligned flattened-embedding layout [N, D]
    x1 = jax.random.normal(jax.random.PRNGKey(0), (16, 128), dtype=jnp.float32)
    o1 = jax.block_until_ready(normalize(x1, power=2))
    assert jnp.allclose(o1, ref_normalize(x1, 2), atol=1e-5, rtol=1e-4), "aligned mismatch"

    # 2) ragged shape: exercises masked edge blocks (no pad/slice round-trips)
    x2 = jax.random.normal(jax.random.PRNGKey(1), (10, 96), dtype=jnp.float32)
    o2 = jax.block_until_ready(normalize(x2, power=2))
    assert jnp.allclose(o2, ref_normalize(x2, 2), atol=1e-5, rtol=1e-4), "ragged mismatch"

    # 3) bf16 input: f32 reduction + scale, single downcast on store
    x3 = jax.random.normal(jax.random.PRNGKey(2), (24, 160), dtype=jnp.bfloat16)
    o3 = jax.block_until_ready(normalize(x3, power=2))
    assert jnp.allclose(o3.astype(jnp.float32),
                        ref_normalize(x3, 2).astype(jnp.float32),
                        atol=2e-2, rtol=2e-2), "bf16 mismatch"

    # 4) non-default power
    x4 = jax.random.normal(jax.random.PRNGKey(3), (16, 128), dtype=jnp.float32)
    o4 = jax.block_until_ready(normalize(x4, power=4))
    assert jnp.allclose(o4, ref_normalize(x4, 4), atol=1e-5, rtol=1e-4), "p=4 mismatch"

    # 5) chunked-D fallback path (forced at a small shape to exercise it)
    x5 = jax.random.normal(jax.random.PRNGKey(4), (10, 300), dtype=jnp.float32)
    o5 = jax.block_until_ready(normalize(x5, power=2, _force_tile_d=128))
    assert jnp.allclose(o5, ref_normalize(x5, 2), atol=1e-5, rtol=1e-4), "chunked mismatch"

    print("KERNEL_OK")
</pallas_src>

<mosaic_0001>
module attributes {stable_mosaic.version = 11 : i64} {
  func.func @_normalize_kernel(%arg0: i32, %arg1: memref<8x128xf32, #tpu.memory_space<vmem>>, %arg2: memref<8x128xf32, #tpu.memory_space<vmem>>) attributes {dimension_semantics = [#tpu.dimension_semantics<parallel>], iteration_bounds = array<i64: 2>, scalar_prefetch = 0 : i64, scratch_operands = 0 : i64, tpu.core_type = #tpu.core_type<tc>, window_params = [{transform_indices = @transform_0, window_bounds = array<i64: 8, 128>}, {transform_indices = @transform_1, window_bounds = array<i64: 8, 128>}]} {
    %c0 = arith.constant 0 : index
    %c0_0 = arith.constant 0 : index
    %0 = vector.load %arg1[%c0, %c0_0] : memref<8x128xf32, #tpu.memory_space<vmem>>, vector<8x128xf32>
    %1 = arith.mulf %0, %0 : vector<8x128xf32>
    %cst = arith.constant dense<0.000000e+00> : vector<8xf32>
    %2 = vector.multi_reduction <add>, %1, %cst [1] : vector<8x128xf32> to vector<8xf32>
    %3 = vector.shape_cast %2 : vector<8xf32> to vector<8x1xf32>
    %4 = math.rsqrt %3 : vector<8x1xf32>
    %5 = vector.broadcast %4 : vector<8x1xf32> to vector<8x128xf32>
    %6 = arith.mulf %0, %5 : vector<8x128xf32>
    %c0_1 = arith.constant 0 : index
    %c0_2 = arith.constant 0 : index
    %7 = vector.load %arg2[%c0_1, %c0_2] : memref<8x128xf32, #tpu.memory_space<vmem>>, vector<8x128xf32>
    tpu.vector_store %arg2[%c0_1, %c0_2], %6 {strides = array<i32>} : memref<8x128xf32, #tpu.memory_space<vmem>>, vector<8x128xf32>,
    return
  }
  func.func @transform_0(%arg0: i32) -> (i32, i32) {
    %c0_i32 = arith.constant 0 : i32
    %c0_i32_0 = arith.constant 0 : i32
    return %arg0, %c0_i32 : i32, i32
  }
  func.func @transform_1(%arg0: i32) -> (i32, i32) {
    %c0_i32 = arith.constant 0 : i32
    %c0_i32_0 = arith.constant 0 : i32
    return %arg0, %c0_i32 : i32, i32
  }
}

</mosaic_0001>

<llo_original>
// kernel: tpu_custom_call.1
$region0: #{tpu_custom_call.1}
  #allocation0 [shape = 'u32[]', space=smem, size = 0x4, offset = 0x4, fixed_abs, tag = 'smem constant byte address 0x4 - core index']
  #allocation1 [shape = 'u32[144,128]{1,0:T(1,128)}', space=vmem, size = 0x12000, scoped, tag = 'internal scratch']
  %s0 = inlined_call_operand.hbm [shape: f32[16,128], index: 0, kind: input, shape index: {}]
  %s1 = inlined_call_operand.hbm [shape: f32[16,128], index: 1, kind: output, shape index: {}]
  %s2 = sld [smem:[#allocation0]]
  $region41: #{tpu_custom_call.1} parent=0
    _
  %s4 = ssub.s32 1, %s2
  %s5 = scalar_select 0, %s4, %s2
  $region1: #{tpu_custom_call.1} parent=0
    #allocation2 [shape = 'u8[8192]{0}', space=vmem, size = 0x2000, scoped, tag = 'input window, operand 0']
    #allocation3 [shape = 's32[2]{0}', space=sflag, size = 0x8, scoped, tag = 'scoped memory for tpu_custom_call.1']
    #allocation4 [shape = 's32[2]{0}', space=sflag, size = 0x8, scoped, tag = 'scoped memory for tpu_custom_call.1']
    #allocation5 [shape = 'u8[8192]{0}', space=vmem, size = 0x2000, scoped, tag = 'output window, operand 0']
    %6 = vsyncpa [#allocation3], 0
    %s7 = scalar_lea.sflag [#allocation3], 1
    %8 = vsyncpa %s7, 0
    %9 = vsyncpa [#allocation4], 0
    %s10 = scalar_lea.sflag [#allocation4], 1
    %11 = vsyncpa %s10, 0
    loop: start=0, step=1, limit=4
    $region2: #{tpu_custom_call.1} parent=1 // loop_pre_header
      _
    $region3: #{tpu_custom_call.1} parent=1 // loop_header
      %s13 = sphi 0, %s17
      %p14 = scmp.ge.s32.totalorder %s13, 4
      %s23 = sphi 0, %s25
      %s26 = sphi 0, %s23
      %s27 = sphi 0, %s26
      %s43 = sphi 0, %s27
      %s49 = sphi 0, %s51
      %s52 = sphi 0, %s49
      %s53 = sphi 0, %s52
      %s69 = sphi 0, %s53
    $region4: #{tpu_custom_call.1} parent=1 // loop_header_branch
      %16 = sbr.rel (%p14) target = $region8
    $region5: #{tpu_custom_call.1} parent=1 // loop_body
      %s18 = ssub.s32 %s13, 1
      %s19 = ssub.s32 %s13, 2
      %s20 = sadd.s32 %s13, 1
      %s21 = ssub.s32 %s13, %s20
      %p22 = scmp.eq.s32.totalorder %s21, 0
      %s24 = sadd.s32 %s23, 1
      %s25 = scalar_select %p22, %s23, %s24
      %p28 = pneg %p22
      %p29 = scmp.eq.s32.totalorder %s13, 1
      %p30 = por %p28, %p29
      %p31 = scmp.ne.s32.totalorder %s23, %s26
      %p32 = scmp.eq.s32.totalorder %s13, 0
      %p33 = por %p31, %p32
      %p34 = scmp.ne.s32.totalorder %s23, %s26
      %p35 = scmp.eq.s32.totalorder %s18, 1
      %p36 = por %p34, %p35
      %p37 = scmp.ne.s32.totalorder %s26, %s27
      %p38 = scmp.eq.s32.totalorder %s18, 0
      %p39 = por %p37, %p38
      %p40 = scmp.ne.s32.totalorder %s26, %s27
      %p41 = scmp.eq.s32.totalorder %s19, 1
      %p42 = por %p40, %p41
      %p44 = scmp.ne.s32.totalorder %s27, %s43
      %p45 = scmp.eq.s32.totalorder %s19, 0
      %p46 = por %p44, %p45
      %s47 = ssub.s32 %s13, %s20
      %p48 = scmp.eq.s32.totalorder %s47, 0
      %s50 = sadd.s32 %s49, 1
      %s51 = scalar_select %p48, %s49, %s50
      %p54 = pneg %p48
      %p55 = scmp.eq.s32.totalorder %s13, 1
      %p56 = por %p54, %p55
      %p57 = scmp.ne.s32.totalorder %s49, %s52
      %p58 = scmp.eq.s32.totalorder %s13, 0
      %p59 = por %p57, %p58
      %p60 = scmp.ne.s32.totalorder %s49, %s52
      %p61 = scmp.eq.s32.totalorder %s18, 1
      %p62 = por %p60, %p61
      %p63 = scmp.ne.s32.totalorder %s52, %s53
      %p64 = scmp.eq.s32.totalorder %s18, 0
      %p65 = por %p63, %p64
      %p66 = scmp.ne.s32.totalorder %s52, %s53
      %p67 = scmp.eq.s32.totalorder %s19, 1
      %p68 = por %p66, %p67
      %p70 = scmp.ne.s32.totalorder %s53, %s69
      %p71 = scmp.eq.s32.totalorder %s19, 0
      %p72 = por %p70, %p71
      %p73 = scmp.le.s32.totalorder 1, %s13
      %p74 = scmp.lt.s32.totalorder %s13, 3
      %p75 = pnand %p73, %p74
      %p76 = pneg %p75
      // Predicated region
      $region9: #{tpu_custom_call.1} parent=5 // pred_check
        _
      $region10: #{tpu_custom_call.1} parent=5 // pred_check_branch
        %78 = sbr.rel (%p75) target = $region12
      $region11: #{tpu_custom_call.1} parent=5 // pred_region
        %s79 = ssub.s32 %s13, 1
      $region12: #{tpu_custom_call.1} parent=5 // pred_fallthru
        _
      %p80 = scmp.lt.s32.totalorder %s13, 2
      // Predicated region
      $region13: #{tpu_custom_call.1} parent=5 // pred_check
        %p81 = pneg %p80
      $region14: #{tpu_custom_call.1} parent=5 // pred_check_branch
        %83 = sbr.rel (%p81) target = $region16
      $region15: #{tpu_custom_call.1} parent=5 // pred_region
        // Predicated region
        $region17: #{tpu_custom_call.1} parent=15 // pred_check
          %p84 = pneg %p33
        $region18: #{tpu_custom_call.1} parent=15 // pred_check_branch
          %86 = sbr.rel (%p84) target = $region20
        $region19: #{tpu_custom_call.1} parent=15 // pred_region
          %s87 = sand.u32 %s23, 1
          %s88 = scalar_lea.sflag [#allocation3], %s87
          %s89 = sand.u32 %s23, 1
          %s90 = smul.addr %s89, 8
          %s91 = scalar_lea.vmem [#allocation2], %s90
          %s93 = ssub.s32 128, 128
          %94 = vsyncadd %s88, %s93
          %s95 = smul.addr %s13, 128
          %s96 = scalar_lea.hbm %s0, %s95
          %s98 = sshll.u32 %s91, 4
          %s99 = int_to_ptr.vmem [resolvable:$true] %s98
          %101 = dma.hbm_to_vmem [thread:$0]  %s96, 128, %s99, %s88
        $region20: #{tpu_custom_call.1} parent=15 // pred_fallthru
          _
      $region16: #{tpu_custom_call.1} parent=5 // pred_fallthru
        _
      %p102 = scmp.le.s32.totalorder 1, %s13
      %p103 = scmp.lt.s32.totalorder %s13, 3
      %p104 = pnand %p102, %p103
      %p105 = pneg %p104
      // Predicated region
      $region21: #{tpu_custom_call.1} parent=5 // pred_check
        _
      $region22: #{tpu_custom_call.1} parent=5 // pred_check_branch
        %107 = sbr.rel (%p104) target = $region24
      $region23: #{tpu_custom_call.1} parent=5 // pred_region
        %s108 = ssub.s32 %s13, 1
        %s109 = sand.u32 %s26, 1
        %s110 = scalar_lea.sflag [#allocation3], %s109
        %s111 = sand.u32 %s26, 1
        %s112 = smul.addr %s111, 8
        %s113 = scalar_lea.vmem [#allocation2], %s112
        // Predicated region
        $region25: #{tpu_custom_call.1} parent=23 // pred_check
          %p114 = pneg %p39
        $region26: #{tpu_custom_call.1} parent=23 // pred_check_branch
          %116 = sbr.rel (%p114) target = $region28
        $region27: #{tpu_custom_call.1} parent=23 // pred_region
          %117 = dma.done %s110, 128
        $region28: #{tpu_custom_call.1} parent=23 // pred_fallthru
          _
        %s118 = sand.u32 %s26, 1
        %s119 = scalar_lea.sflag [#allocation3], %s118
        %s120 = sand.u32 %s26, 1
        %s121 = smul.addr %s120, 8
        %s122 = scalar_lea.vmem [#allocation2], %s121
        %p123 = pneg %p39
        %p124 = pneg %p36
        %p125 = pneg %p65
        %p126 = pneg %p62
        %s127 = sand.u32 %s52, 1
        %s128 = scalar_lea.sflag [#allocation4], %s127
        %s129 = sand.u32 %s52, 1
        %s130 = smul.addr %s129, 8
        %s131 = scalar_lea.vmem [#allocation5], %s130
        %v132 = vld [vmem:[%s113] sm:$0xff]
        %v133 = vmul.f32 %v132, %v132
        %134 = vadd.xlane.f32.xlu0 %v133
        %v135 = vpop.xlane.xlu0 %134
        %v136 = vrsqrt.pop %v135
        %v137 = vmul.f32 %v132, %v136
        %138 = vst [vmem:[%s131] sm:$0xff] %v137
        %s139 = sand.u32 %s52, 1
        %s140 = scalar_lea.sflag [#allocation4], %s139
        %s141 = sand.u32 %s52, 1
        %s142 = smul.addr %s141, 8
        %s143 = scalar_lea.vmem [#allocation5], %s142
        // Predicated region
        $region29: #{tpu_custom_call.1} parent=23 // pred_check
          %p144 = pneg %p62
        $region30: #{tpu_custom_call.1} parent=23 // pred_check_branch
          %146 = sbr.rel (%p144) target = $region32
        $region31: #{tpu_custom_call.1} parent=23 // pred_region
          %s148 = ssub.s32 128, 128
          %149 = vsyncadd %s140, %s148
          %s150 = smul.addr %s18, 128
          %s151 = scalar_lea.hbm %s1, %s150
          %s153 = sshll.u32 %s143, 4
          %s154 = int_to_ptr.vmem [resolvable:$true] %s153
          %156 = dma.vmem_to_hbm [thread:$0]  %s154, 128, %s151, %s140
        $region32: #{tpu_custom_call.1} parent=23 // pred_fallthru
          _
      $region24: #{tpu_custom_call.1} parent=5 // pred_fallthru
        _
      %p157 = scmp.le.s32.totalorder 2, %s13
      // Predicated region
      $region33: #{tpu_custom_call.1} parent=5 // pred_check
        %p158 = pneg %p157
      $region34: #{tpu_custom_call.1} parent=5 // pred_check_branch
        %160 = sbr.rel (%p158) target = $region36
      $region35: #{tpu_custom_call.1} parent=5 // pred_region
        %s161 = ssub.s32 %s13, 2
        // Predicated region
        $region37: #{tpu_custom_call.1} parent=35 // pred_check
          %p162 = pneg %p68
        $region38: #{tpu_custom_call.1} parent=35 // pred_check_branch
          %164 = sbr.rel (%p162) target = $region40
        $region39: #{tpu_custom_call.1} parent=35 // pred_region
          %s165 = sand.u32 %s53, 1
          %s166 = scalar_lea.sflag [#allocation4], %s165
          %s167 = sand.u32 %s53, 1
          %s168 = smul.addr %s167, 8
          %s169 = scalar_lea.vmem [#allocation5], %s168
          %170 = dma.done %s166, 128
        $region40: #{tpu_custom_call.1} parent=35 // pred_fallthru
          _
      $region36: #{tpu_custom_call.1} parent=5 // pred_fallthru
        _
    $region6: #{tpu_custom_call.1} parent=1 // loop_footer
      %s17 = sadd.s32 1, %s13
    $region7: #{tpu_custom_call.1} parent=1 // loop_footer_branch
      %12 = sbr.rel target = $region3
    $region8: #{tpu_custom_call.1} parent=1 // loop_exit
      _
    %171 = vsyncpa [#allocation3], 1
    %s172 = scalar_lea.sflag [#allocation3], 1
    %173 = vsyncpa %s172, 1
    %174 = vsyncpa [#allocation4], 1
    %s175 = scalar_lea.sflag [#allocation4], 1
    %176 = vsyncpa %s175, 1

</llo_original>
